<compile_context>
chip_gen: v7x
topology: tpu7x:2x2x1
jax: 0.10.0
libtpu: 0.0.40
codegen_flags: <defaults>
</compile_context>

<pallas_src>
import functools
import math

import jax
import jax.numpy as jnp
from jax.experimental import pallas as pl
from jax.experimental.pallas import tpu as pltpu


# --------------------------------------------------------------------------- #
# Chip / tiling policy
# --------------------------------------------------------------------------- #
def _chip_config():
    """Per-generation VMEM limit, input-block target, TC count, bf16-VALU support."""
    kind = ""
    try:
        kind = jax.devices()[0].device_kind.lower()
    except Exception:
        pass
    if "v5" in kind:
        cfg = dict(vmem_limit=64 << 20, block_target=8 << 20, two_tc=False, is_v5=True)
    elif "v6" in kind:
        cfg = dict(vmem_limit=64 << 20, block_target=8 << 20, two_tc=False, is_v5=False)
    elif "v7" in kind:
        cfg = dict(vmem_limit=32 << 20, block_target=4 << 20, two_tc=True, is_v5=False)
    else:  # unknown generation -> conservative (v7x-like) limits
        cfg = dict(vmem_limit=32 << 20, block_target=4 << 20, two_tc=False, is_v5=False)
    # Refine from the runtime hardware query when available (kept defensive).
    try:
        info = pltpu.get_tpu_info()
        phys = int(getattr(info, "vmem_capacity_bytes", 0))
        if phys:
            cfg["vmem_limit"] = min(cfg["vmem_limit"], phys // 2)
    except Exception:
        pass
    return cfg


def _pick_batch_tile(B, per_b_bytes, cfg):
    """Batch rows per grid step.  Blocks ~block_target bytes (in+out double-buffered
    stays well inside vmem_limit).  On 2-TC chips keep >=2 (preferably even) steps;
    on single-TC chips never split just to lengthen the grid."""
    budget = min(cfg["block_target"], cfg["vmem_limit"] // 5)
    cap = max(1, min(budget // per_b_bytes, B))
    if cfg["two_tc"] and B >= 2:
        cap = min(cap, (B + 1) // 2)            # >= 2 grid steps for the two TCs
    bt = cap
    for d in range(cap, cap // 2, -1):          # prefer a nearby exact divisor of B
        if B % d == 0:
            bt = d
            break
    if cfg["two_tc"] and B >= 2 and pl.cdiv(B, bt) % 2 == 1:
        for d in range(bt - 1, bt // 2, -1):    # prefer an even number of steps
            if pl.cdiv(B, d) % 2 == 0:
                bt = d
                break
    return bt


# --------------------------------------------------------------------------- #
# Kernels
# --------------------------------------------------------------------------- #
def _conv1d_channels(pooled, w_ref):
    """Zero-padded 1-D cross-correlation over the channel (lane) axis of a (n, C)
    f32 tensor; k taps read from SMEM.  Center tap needs no roll/mask."""
    k = w_ref.shape[0]
    pad = (k - 1) // 2
    C = pooled.shape[1]
    acc = w_ref[pad] * pooled
    if k > 1:
        cidx = jax.lax.broadcasted_iota(jnp.int32, pooled.shape, 1)
        for j in range(k):
            if j == pad:
                continue
            s = pad - j                          # out[c] += w[j] * pooled[c - s]
            shifted = pltpu.roll(pooled, shift=s % C, axis=1)
            valid = (cidx >= s) & (cidx < C + s)   # zero padding, not circular
            acc = acc + w_ref[j] * jnp.where(valid, shifted, 0.0)
    return acc


def _fused_kernel(w_ref, x_ref, o_ref, *, full_f32):
    """Single-pass path: pool + conv + sigmoid + scale on a (bt, C, HW) block."""
    x = x_ref[...]
    hw = x.shape[-1]
    if full_f32:
        xc = x.astype(jnp.float32)
        pooled = jnp.sum(xc, axis=2) * (1.0 / hw) + jnp.max(xc, axis=2)
    else:
        # f32 accumulation for the reductions, but no full f32 copy of the block.
        pooled = (jnp.sum(x, axis=2, dtype=jnp.float32) * (1.0 / hw)
                  + jnp.max(x, axis=2).astype(jnp.float32))
    gate = jax.nn.sigmoid(_conv1d_channels(pooled, w_ref))        # (bt, C) f32
    if full_f32:
        o_ref[...] = (xc * gate[:, :, None]).astype(o_ref.dtype)
    else:
        o_ref[...] = x * gate.astype(x.dtype)[:, :, None]         # native-dtype store


def _pool_gate_kernel(w_ref, x_ref, gate_ref, sum_ref, max_ref, *, hw_total, thw):
    """Fallback pass 1: accumulate sum/max over HW tiles; emit the (1,C,1) gate."""
    h = pl.program_id(1)
    x = x_ref[...].astype(jnp.float32)                            # (1, C, thw)
    if hw_total % thw:                                            # ragged last tile
        col = jax.lax.broadcasted_iota(jnp.int32, x.shape, 2)
        valid = col < (hw_total - h * thw)
        part_sum = jnp.sum(jnp.where(valid, x, 0.0), axis=2)
        part_max = jnp.max(jnp.where(valid, x, -jnp.inf), axis=2)
    else:
        part_sum = jnp.sum(x, axis=2)
        part_max = jnp.max(x, axis=2)

    @pl.when(h == 0)
    def _():
        sum_ref[...] = jnp.zeros_like(sum_ref)
        max_ref[...] = jnp.full_like(max_ref, -jnp.inf)

    sum_ref[...] = sum_ref[...] + part_sum
    max_ref[...] = jnp.maximum(max_ref[...], part_max)

    @pl.when(h == pl.num_programs(1) - 1)
    def _():
        pooled = sum_ref[...] * (1.0 / hw_total) + max_ref[...]
        gate = jax.nn.sigmoid(_conv1d_channels(pooled, w_ref))
        gate_ref[...] = gate[:, :, None]


def _gate_mul_kernel(gate_ref, x_ref, o_ref, *, full_f32):
    """Fallback pass 2: broadcast the (1,C,1) gate over an HW tile of x."""
    x = x_ref[...]
    g = gate_ref[...]                                             # (1, C, 1) f32
    if full_f32:
        o_ref[...] = (x.astype(jnp.float32) * g).astype(o_ref.dtype)
    else:
        o_ref[...] = x * g.astype(x.dtype)


# --------------------------------------------------------------------------- #
# Wrapper
# --------------------------------------------------------------------------- #
def channel_attention_conv(x, weight, *, hw_block=None):
    """x: (B, C, H, W); weight: (k,) Conv1d(1,1,k,padding=(k-1)//2,bias=False) kernel.
    hw_block: testing hook that forces the HW-tiled two-pass fallback with the given
    HW tile (must be a multiple of 128 or equal to H*W)."""
    B, C, H, W = x.shape
    HW = H * W
    k = int(weight.shape[0])
    assert k % 2 == 1 and (k - 1) // 2 < C, "roll-based conv assumes (k-1)//2 < C"

    cfg = _chip_config()
    full_f32 = cfg["is_v5"] or x.dtype == jnp.float32   # v5e: no bf16 VALU -> f32 path
    xr = x.reshape(B, C, HW)
    w32 = weight.astype(jnp.float32)
    per_b = C * HW * x.dtype.itemsize
    cparams = dict(vmem_limit_bytes=cfg["vmem_limit"])

    if hw_block is None and per_b <= cfg["vmem_limit"] // 5:
        # ---- single-pass fused path -------------------------------------- #
        bt = _pick_batch_tile(B, per_b, cfg)
        out = pl.pallas_call(
            functools.partial(_fused_kernel, full_f32=full_f32),
            out_shape=jax.ShapeDtypeStruct((B, C, HW), x.dtype),
            grid_spec=pltpu.PrefetchScalarGridSpec(
                num_scalar_prefetch=1,          # (k,) weights -> SMEM, no per-step DMA
                grid=(pl.cdiv(B, bt),),
                in_specs=[pl.BlockSpec((bt, C, HW), lambda b, w: (b, 0, 0))],
                out_specs=pl.BlockSpec((bt, C, HW), lambda b, w: (b, 0, 0)),
            ),
            compiler_params=pltpu.CompilerParams(
                dimension_semantics=("parallel",), **cparams),
        )(w32, xr)
    else:
        # ---- VMEM-overflow fallback: two passes, HW tiled ------------------ #
        if hw_block is not None:
            thw = int(hw_block)
        else:
            thw_cap = max(128, cfg["block_target"] // max(1, C * x.dtype.itemsize))
            thw = min(HW, max(128, (thw_cap // 128) * 128))
        n_hw = pl.cdiv(HW, thw)

        gate = pl.pallas_call(
            functools.partial(_pool_gate_kernel, hw_total=HW, thw=thw),
            out_shape=jax.ShapeDtypeStruct((B, C, 1), jnp.float32),
            grid_spec=pltpu.PrefetchScalarGridSpec(
                num_scalar_prefetch=1,
                grid=(B, n_hw),                 # reduction (HW) axis last
                in_specs=[pl.BlockSpec((1, C, thw), lambda b, h, w: (b, 0, h))],
                out_specs=pl.BlockSpec((1, C, 1), lambda b, h, w: (b, 0, 0)),
                scratch_shapes=[pltpu.VMEM((1, C), jnp.float32),
                                pltpu.VMEM((1, C), jnp.float32)],
            ),
            compiler_params=pltpu.CompilerParams(
                dimension_semantics=("parallel", "arbitrary"), **cparams),
        )(w32, xr)

        out = pl.pallas_call(
            functools.partial(_gate_mul_kernel, full_f32=full_f32),
            out_shape=jax.ShapeDtypeStruct((B, C, HW), x.dtype),
            grid=(B, n_hw),
            in_specs=[pl.BlockSpec((1, C, 1), lambda b, h: (b, 0, 0)),
                      pl.BlockSpec((1, C, thw), lambda b, h: (b, 0, h))],
            out_specs=pl.BlockSpec((1, C, thw), lambda b, h: (b, 0, h)),
            compiler_params=pltpu.CompilerParams(
                dimension_semantics=("parallel", "parallel"), **cparams),
        )(gate, xr)

    return out.reshape(B, C, H, W)


# --------------------------------------------------------------------------- #
# Pure-JAX reference + self-test
# --------------------------------------------------------------------------- #
def _reference(x, weight):
    """Mirrors the PyTorch forward (f32 math)."""
    k = weight.shape[0]
    pad = (k - 1) // 2
    xf = x.astype(jnp.float32)
    avg = jnp.mean(xf, axis=(2, 3))                     # (B, C)
    mx = jnp.max(xf, axis=(2, 3))                       # (B, C)

    def conv1d(v):                                      # conv over channel axis
        vp = jnp.pad(v, ((0, 0), (pad, pad)))
        return sum(weight[j] * vp[:, j:j + v.shape[1]] for j in range(k))

    v = jax.nn.sigmoid(conv1d(avg) + conv1d(mx))
    return xf * v[:, :, None, None]


if __name__ == "__main__":
    B, C, H, W = 2, 32, 16, 16
    gamma, b = 2, 1
    kernel_size = int(abs((math.log(C, 2) + b) / gamma))
    kernel_size = kernel_size if kernel_size % 2 else kernel_size + 1   # -> 3 for C=32

    key = jax.random.PRNGKey(0)
    kx, kw, kx2 = jax.random.split(key, 3)
    bound = 1.0 / math.sqrt(kernel_size)
    weight = jax.random.uniform(kw, (kernel_size,), jnp.float32, -bound, bound)

    # 1) fused path, f32, HW = 256 (lane-dense stores)
    x = jax.random.normal(kx, (B, C, H, W), jnp.float32)
    out = jax.block_until_ready(channel_attention_conv(x, weight))
    ref = _reference(x, weight)
    assert out.shape == x.shape and out.dtype == x.dtype
    assert jnp.allclose(out, ref, atol=1e-5, rtol=1e-5)

    # 2) fused path, bf16 input (f32-accumulated pooling, native-dtype multiply/store)
    xb = x.astype(jnp.bfloat16)
    outb = jax.block_until_ready(channel_attention_conv(xb, weight))
    assert outb.dtype == jnp.bfloat16
    assert jnp.allclose(outb.astype(jnp.float32), _reference(xb, weight),
                        atol=1e-1, rtol=5e-2)

    # 3) forced HW-tiled two-pass fallback with a ragged final HW tile (HW = 144)
    x3 = jax.random.normal(kx2, (2, 32, 12, 12), jnp.float32)
    ref3 = _reference(x3, weight)
    out3 = jax.block_until_ready(channel_attention_conv(x3, weight, hw_block=128))
    assert jnp.allclose(out3, ref3, atol=1e-5, rtol=1e-5)

    # 4) fused path with HW % 128 != 0 (masked stores, still correct)
    out4 = jax.block_until_ready(channel_attention_conv(x3, weight))
    assert jnp.allclose(out4, ref3, atol=1e-5, rtol=1e-5)

    print("KERNEL_OK")
</pallas_src>

<mosaic_0001>
module attributes {stable_mosaic.version = 11 : i64} {
  func.func @_fused_kernel(%arg0: i32, %arg1: memref<3xf32, #tpu.memory_space<smem>>, %arg2: memref<2x32x256xf32, #tpu.memory_space<vmem>>, %arg3: memref<2x32x256xf32, #tpu.memory_space<vmem>>) attributes {dimension_semantics = [#tpu.dimension_semantics<parallel>], iteration_bounds = array<i64: 1>, scalar_prefetch = 1 : i64, scratch_operands = 0 : i64, tpu.core_type = #tpu.core_type<tc>, window_params = [{transform_indices = @transform_0, window_bounds = array<i64: 2, 32, 256>}, {transform_indices = @transform_1, window_bounds = array<i64: 2, 32, 256>}]} {
    %c0 = arith.constant 0 : index
    %c0_0 = arith.constant 0 : index
    %c0_1 = arith.constant 0 : index
    %0 = vector.load %arg2[%c0, %c0_0, %c0_1] : memref<2x32x256xf32, #tpu.memory_space<vmem>>, vector<2x32x256xf32>
    %cst = arith.constant dense<0.000000e+00> : vector<2x32xf32>
    %1 = vector.multi_reduction <add>, %0, %cst [2] : vector<2x32x256xf32> to vector<2x32xf32>
    %cst_2 = arith.constant 3.906250e-03 : f32
    %2 = vector.broadcast %cst_2 : f32 to vector<2x32xf32>
    %3 = arith.mulf %1, %2 : vector<2x32xf32>
    %cst_3 = arith.constant dense<0xFF800000> : vector<2x32xf32>
    %4 = vector.multi_reduction <maximumf>, %0, %cst_3 [2] : vector<2x32x256xf32> to vector<2x32xf32>
    %5 = arith.addf %3, %4 : vector<2x32xf32>
    %c1 = arith.constant 1 : index
    %6 = memref.load %arg1[%c1] : memref<3xf32, #tpu.memory_space<smem>>
    %7 = vector.broadcast %6 : f32 to vector<2x32xf32>
    %8 = arith.mulf %7, %5 : vector<2x32xf32>
    %9 = tpu.iota {dimensions = array<i32: 1>} : vector<2x32xi32>
    %c1_i32 = arith.constant 1 : i32
    %10 = tpu.dynamic_rotate %5 by %c1_i32 dim 1 : vector<2x32xf32>, i32 -> vector<2x32xf32>
    %c1_i32_4 = arith.constant 1 : i32
    %11 = vector.broadcast %c1_i32_4 : i32 to vector<2x32xi32>
    %12 = arith.cmpi sge, %9, %11 : vector<2x32xi32>
    %c33_i32 = arith.constant 33 : i32
    %13 = vector.broadcast %c33_i32 : i32 to vector<2x32xi32>
    %14 = arith.cmpi slt, %9, %13 : vector<2x32xi32>
    %15 = arith.andi %12, %14 : vector<2x32xi1>
    %c0_5 = arith.constant 0 : index
    %16 = memref.load %arg1[%c0_5] : memref<3xf32, #tpu.memory_space<smem>>
    %cst_6 = arith.constant 0.000000e+00 : f32
    %17 = vector.broadcast %cst_6 : f32 to vector<2x32xf32>
    %18 = arith.select %15, %10, %17 : vector<2x32xi1>, vector<2x32xf32>
    %19 = vector.broadcast %16 : f32 to vector<2x32xf32>
    %20 = arith.mulf %19, %18 : vector<2x32xf32>
    %21 = arith.addf %8, %20 : vector<2x32xf32>
    %c31_i32 = arith.constant 31 : i32
    %22 = tpu.dynamic_rotate %5 by %c31_i32 dim 1 : vector<2x32xf32>, i32 -> vector<2x32xf32>
    %c-1_i32 = arith.constant -1 : i32
    %23 = vector.broadcast %c-1_i32 : i32 to vector<2x32xi32>
    %24 = arith.cmpi sge, %9, %23 : vector<2x32xi32>
    %c31_i32_7 = arith.constant 31 : i32
    %25 = vector.broadcast %c31_i32_7 : i32 to vector<2x32xi32>
    %26 = arith.cmpi slt, %9, %25 : vector<2x32xi32>
    %27 = arith.andi %24, %26 : vector<2x32xi1>
    %c2 = arith.constant 2 : index
    %28 = memref.load %arg1[%c2] : memref<3xf32, #tpu.memory_space<smem>>
    %cst_8 = arith.constant 0.000000e+00 : f32
    %29 = vector.broadcast %cst_8 : f32 to vector<2x32xf32>
    %30 = arith.select %27, %22, %29 : vector<2x32xi1>, vector<2x32xf32>
    %31 = vector.broadcast %28 : f32 to vector<2x32xf32>
    %32 = arith.mulf %31, %30 : vector<2x32xf32>
    %33 = arith.addf %21, %32 : vector<2x32xf32>
    %34 = arith.negf %33 : vector<2x32xf32>
    %35 = math.exp %34 : vector<2x32xf32>
    %cst_9 = arith.constant 1.000000e+00 : f32
    %36 = vector.broadcast %cst_9 : f32 to vector<2x32xf32>
    %37 = arith.addf %36, %35 : vector<2x32xf32>
    %38 = arith.divf %36, %37 : vector<2x32xf32>
    %39 = vector.shape_cast %38 : vector<2x32xf32> to vector<2x32x1xf32>
    %40 = vector.broadcast %39 : vector<2x32x1xf32> to vector<2x32x256xf32>
    %41 = arith.mulf %0, %40 : vector<2x32x256xf32>
    %c0_10 = arith.constant 0 : index
    %c0_11 = arith.constant 0 : index
    %c0_12 = arith.constant 0 : index
    %42 = vector.load %arg3[%c0_10, %c0_11, %c0_12] : memref<2x32x256xf32, #tpu.memory_space<vmem>>, vector<2x32x256xf32>
    tpu.vector_store %arg3[%c0_10, %c0_11, %c0_12], %41 {strides = array<i32>} : memref<2x32x256xf32, #tpu.memory_space<vmem>>, vector<2x32x256xf32>,
    return
  }
  func.func @transform_0(%arg0: i32, %arg1: memref<3xf32, #tpu.memory_space<smem>>) -> (i32, i32, i32) {
    %c0_i32 = arith.constant 0 : i32
    %c0_i32_0 = arith.constant 0 : i32
    %c0_i32_1 = arith.constant 0 : i32
    return %arg0, %c0_i32, %c0_i32_0 : i32, i32, i32
  }
  func.func @transform_1(%arg0: i32, %arg1: memref<3xf32, #tpu.memory_space<smem>>) -> (i32, i32, i32) {
    %c0_i32 = arith.constant 0 : i32
    %c0_i32_0 = arith.constant 0 : i32
    %c0_i32_1 = arith.constant 0 : i32
    return %arg0, %c0_i32, %c0_i32_0 : i32, i32, i32
  }
}

</mosaic_0001>

<llo_original>
// kernel: tpu_custom_call.1
$region0: #{tpu_custom_call.1}
  #allocation0 [shape = 'u32[]', space=smem, size = 0x4, offset = 0x4, fixed_abs, tag = 'smem constant byte address 0x4 - core index']
  #allocation1 [shape = 'u32[144,128]{1,0:T(1,128)}', space=vmem, size = 0x12000, scoped, tag = 'internal scratch']
  #allocation2 [shape = 's32[1]{0}', space=sflag, size = 0x4, scoped, tag = 'scoped memory for tpu_custom_call.1']
  #allocation3 [shape = 'u8[512]{0}', space=smem, size = 0x200, scoped, tag = 'prefetched SMEM operand 0']
  %s0 = inlined_call_operand.hbm [shape: f32[3], index: 0, kind: input, shape index: {}]
  %s1 = inlined_call_operand.hbm [shape: f32[2,32,256], index: 1, kind: input, shape index: {}]
  %s2 = inlined_call_operand.hbm [shape: f32[2,32,256], index: 2, kind: output, shape index: {}]
  %s3 = sld [smem:[#allocation0]]
  $region18: #{tpu_custom_call.1} parent=0
    _
  %s5 = ssub.s32 1, %s3
  %s6 = scalar_select 0, %s5, %s3
  %8 = dma.hbm_to_smem %s0, 16, [#allocation3], [#allocation2]
  %9 = dma.done [#allocation2], 16
  %10 = sfence
  $region1: #{tpu_custom_call.1} parent=0
    #allocation4 [shape = 'u8[65536]{0}', space=vmem, size = 0x10000, scoped, tag = 'input window, operand 1, single buffered']
    #allocation5 [shape = 's32[1]{0}', space=sflag, size = 0x4, scoped, tag = 'scoped memory for tpu_custom_call.1']
    #allocation6 [shape = 's32[1]{0}', space=sflag, size = 0x4, scoped, tag = 'scoped memory for tpu_custom_call.1']
    #allocation7 [shape = 'u8[65536]{0}', space=vmem, size = 0x10000, scoped, tag = 'output window, operand 0, single buffered']
    %11 = vsyncpa [#allocation5], 0
    %12 = vsyncpa [#allocation6], 0
    // Predicated region
    $region2: #{tpu_custom_call.1} parent=1 // pred_check
      _
    $region3: #{tpu_custom_call.1} parent=1 // pred_check_branch
      %14 = sbr.rel (0) target = $region5
    $region4: #{tpu_custom_call.1} parent=1 // pred_region
      %s16 = ssub.s32 2048, 2048
      %17 = vsyncadd [#allocation5], %s16
      %s18 = sshll.u32 [#allocation4], 4
      %s19 = int_to_ptr.vmem [resolvable:$true] %s18
      %24 = dma.hbm_to_vmem [thread:$0]  %s1, 2048, %s19, [#allocation5], 256, 256, 16
    $region5: #{tpu_custom_call.1} parent=1 // pred_fallthru
      _
    // Predicated region
    $region6: #{tpu_custom_call.1} parent=1 // pred_check
      _
    $region7: #{tpu_custom_call.1} parent=1 // pred_check_branch
      %26 = sbr.rel (0) target = $region9
    $region8: #{tpu_custom_call.1} parent=1 // pred_region
      %27 = dma.done [#allocation5], 2048
    $region9: #{tpu_custom_call.1} parent=1 // pred_fallthru
      _
    %v28 = vld [vmem:[#allocation4] sm:$0xff]
    %v29 = vld [vmem:[#allocation4 + $0x8] sm:$0xff]
    %v30 = vld [vmem:[#allocation4 + $0x10] sm:$0xff]
    %v31 = vld [vmem:[#allocation4 + $0x18] sm:$0xff]
    %v32 = vld [vmem:[#allocation4 + $0x20] sm:$0xff]
    %v33 = vld [vmem:[#allocation4 + $0x28] sm:$0xff]
    %v34 = vld [vmem:[#allocation4 + $0x30] sm:$0xff]
    %v35 = vld [vmem:[#allocation4 + $0x38] sm:$0xff]
    %v36 = vld [vmem:[#allocation4 + $0x40] sm:$0xff]
    %v37 = vld [vmem:[#allocation4 + $0x48] sm:$0xff]
    %v38 = vld [vmem:[#allocation4 + $0x50] sm:$0xff]
    %v39 = vld [vmem:[#allocation4 + $0x58] sm:$0xff]
    %v40 = vld [vmem:[#allocation4 + $0x60] sm:$0xff]
    %v41 = vld [vmem:[#allocation4 + $0x68] sm:$0xff]
    %v42 = vld [vmem:[#allocation4 + $0x70] sm:$0xff]
    %v43 = vld [vmem:[#allocation4 + $0x78] sm:$0xff]
    %v44 = vadd.f32 %v28, %v29
    %45 = vadd.xlane.f32.xlu0 %v44
    %v46 = vpop.xlane.xlu0 %45
    %v47 = vadd.f32 %v30, %v31
    %48 = vadd.xlane.f32.xlu0 %v47
    %v49 = vpop.xlane.xlu0 %48
    %v50 = vadd.f32 %v32, %v33
    %51 = vadd.xlane.f32.xlu0 %v50
    %v52 = vpop.xlane.xlu0 %51
    %v53 = vadd.f32 %v34, %v35
    %54 = vadd.xlane.f32.xlu0 %v53
    %v55 = vpop.xlane.xlu0 %54
    %v56 = vadd.f32 %v36, %v37
    %57 = vadd.xlane.f32.xlu0 %v56
    %v58 = vpop.xlane.xlu0 %57
    %v59 = vadd.f32 %v38, %v39
    %60 = vadd.xlane.f32.xlu0 %v59
    %v61 = vpop.xlane.xlu0 %60
    %v62 = vadd.f32 %v40, %v41
    %63 = vadd.xlane.f32.xlu0 %v62
    %v64 = vpop.xlane.xlu0 %63
    %v65 = vadd.f32 %v42, %v43
    %66 = vadd.xlane.f32.xlu0 %v65
    %v67 = vpop.xlane.xlu0 %66
    %v68 = vmul.f32 %v46, 0.00390625
    %v69 = vmul.f32 %v49, 0.00390625
    %v70 = vmul.f32 %v52, 0.00390625
    %v71 = vmul.f32 %v55, 0.00390625
    %v72 = vmul.f32 %v58, 0.00390625
    %v73 = vmul.f32 %v61, 0.00390625
    %v74 = vmul.f32 %v64, 0.00390625
    %v75 = vmul.f32 %v67, 0.00390625
    %v76 = vmax.f32 %v28, %v29
    %77 = vmax.xlane.f32.xlu0 %v76
    %v78 = vpop.xlane.xlu0 %77
    %v79 = vmax.f32 %v30, %v31
    %80 = vmax.xlane.f32.xlu0 %v79
    %v81 = vpop.xlane.xlu0 %80
    %v82 = vmax.f32 %v32, %v33
    %83 = vmax.xlane.f32.xlu0 %v82
    %v84 = vpop.xlane.xlu0 %83
    %v85 = vmax.f32 %v34, %v35
    %86 = vmax.xlane.f32.xlu0 %v85
    %v87 = vpop.xlane.xlu0 %86
    %v88 = vmax.f32 %v36, %v37
    %89 = vmax.xlane.f32.xlu0 %v88
    %v90 = vpop.xlane.xlu0 %89
    %v91 = vmax.f32 %v38, %v39
    %92 = vmax.xlane.f32.xlu0 %v91
    %v93 = vpop.xlane.xlu0 %92
    %v94 = vmax.f32 %v40, %v41
    %95 = vmax.xlane.f32.xlu0 %v94
    %v96 = vpop.xlane.xlu0 %95
    %v97 = vmax.f32 %v42, %v43
    %98 = vmax.xlane.f32.xlu0 %v97
    %v99 = vpop.xlane.xlu0 %98
    %v100 = vadd.f32 %v68, %v78
    %v101 = vadd.f32 %v69, %v81
    %v102 = vadd.f32 %v70, %v84
    %v103 = vadd.f32 %v71, %v87
    %v104 = vadd.f32 %v72, %v90
    %v105 = vadd.f32 %v73, %v93
    %v106 = vadd.f32 %v74, %v96
    %v107 = vadd.f32 %v75, %v99
    %s108 = sld [smem:[#allocation3 + $0x1]]
    %v109 = vstv %s108
    %v110 = vmul.f32 %v109, %v100
    %v111 = vmul.f32 %v109, %v101
    %v112 = vmul.f32 %v109, %v102
    %v113 = vmul.f32 %v109, %v103
    %v114 = vmul.f32 %v109, %v104
    %v115 = vmul.f32 %v109, %v105
    %v116 = vmul.f32 %v109, %v106
    %v117 = vmul.f32 %v109, %v107
    %v118 = vlaneseq
    %v119 = vand.u32 %v118, 127
    %v128 = vlaneseq
    %v129 = vshrl.u32 %v128, 7
    %v130 = vsub.s32 %v119, %v129
    %v131 = vrot.slane %v100, %v130
    %v132 = vadd.s32 %v119, 4294967288
    %v133 = vlaneseq
    %v134 = vshrl.u32 %v133, 7
    %v135 = vsub.s32 %v132, %v134
    %v136 = vrot.slane %v101, %v135
    %vm137 = vcmask 130112
    %v138 = vsel %vm137, %v136, %v131
    %v139 = vadd.s32 %v119, 4294967280
    %v140 = vlaneseq
    %v141 = vshrl.u32 %v140, 7
    %v142 = vsub.s32 %v139, %v141
    %v143 = vrot.slane %v102, %v142
    %vm144 = vcmask 195712
    %v145 = vsel %vm144, %v143, %v138
    %v146 = vadd.s32 %v119, 4294967272
    %v147 = vlaneseq
    %v148 = vshrl.u32 %v147, 7
    %v149 = vsub.s32 %v146, %v148
    %v150 = vrot.slane %v103, %v149
    %vm151 = vcmask 261312
    %v152 = vsel %vm151, %v150, %v145
    %v153 = vlaneseq
    %v154 = vshrl.u32 %v153, 7
    %v155 = vsub.s32 %v119, %v154
    %v156 = vrot.slane %v104, %v155
    %v157 = vlaneseq
    %v158 = vshrl.u32 %v157, 7
    %v159 = vsub.s32 %v132, %v158
    %v160 = vrot.slane %v105, %v159
    %v161 = vsel %vm137, %v160, %v156
    %v162 = vlaneseq
    %v163 = vshrl.u32 %v162, 7
    %v164 = vsub.s32 %v139, %v163
    %v165 = vrot.slane %v106, %v164
    %v166 = vsel %vm144, %v165, %v161
    %v167 = vlaneseq
    %v168 = vshrl.u32 %v167, 7
    %v169 = vsub.s32 %v146, %v168
    %v170 = vrot.slane %v107, %v169
    %v171 = vsel %vm151, %v170, %v166
    %vm172 = vcmask 1041409
    %v173 = vsel %vm172, %v171, %v152
    %vm175 = vcmask 1047808
    %176 = vrot.lane.b32.xlu0 %v173, 32
    %v177 = vpop.permute.xlu0 %176
    %v178 = vsel %vm175, %v177, %v173
    %179 = vrot.lane.b32.xlu0 %v178, 32
    %v180 = vpop.permute.xlu0 %179
    %v181 = vsel %vm175, %v180, %v173
    %vm182 = vcmp.ge.s32.totalorder %v119, 1
    %vm183 = vcmp.lt.s32.totalorder %v119, 33
    %vm184 = vmand %vm182, %vm183
    %s185 = sld [smem:[#allocation3]]
    %187 = vrot.lane.b32.xlu0 %v181, 97
    %v188 = vpop.permute.xlu0 %187
    %v190 = vsel %vm184, %v188, 0.0
    %v191 = vstv %s185
    %v192 = vmul.f32 %v191, %v190
    %v194 = vlaneseq
    %v195 = vshrl.u32 %v194, 7
    %v196 = vsub.s32 0, %v195
    %v197 = vrot.slane %v192, %v196
    %199 = vbcast.lane.b32.xlu0 %v197, 256
    %v200 = vpop.permute.xlu0 %199
    %s202 = sor.u32 256, 8
    %203 = vbcast.lane.b32.xlu0 %v197, %s202
    %v204 = vpop.permute.xlu0 %203
    %s206 = sor.u32 256, 16
    %207 = vbcast.lane.b32.xlu0 %v197, %s206
    %v208 = vpop.permute.xlu0 %207
    %s210 = sor.u32 256, 24
    %211 = vbcast.lane.b32.xlu0 %v197, %s210
    %v212 = vpop.permute.xlu0 %211
    %v213 = vlaneseq
    %v214 = vshrl.u32 %v213, 7
    %v215 = vsub.s32 1, %v214
    %v216 = vrot.slane %v192, %v215
    %218 = vbcast.lane.b32.xlu0 %v216, 256
    %v219 = vpop.permute.xlu0 %218
    %s221 = sor.u32 256, 8
    %222 = vbcast.lane.b32.xlu0 %v216, %s221
    %v223 = vpop.permute.xlu0 %222
    %s225 = sor.u32 256, 16
    %226 = vbcast.lane.b32.xlu0 %v216, %s225
    %v227 = vpop.permute.xlu0 %226
    %s229 = sor.u32 256, 24
    %230 = vbcast.lane.b32.xlu0 %v216, %s229
    %v231 = vpop.permute.xlu0 %230
    %v240 = vadd.f32 %v110, %v200
    %v241 = vadd.f32 %v111, %v204
    %v242 = vadd.f32 %v112, %v208
    %v243 = vadd.f32 %v113, %v212
    %v244 = vadd.f32 %v114, %v219
    %v245 = vadd.f32 %v115, %v223
    %v246 = vadd.f32 %v116, %v227
    %v247 = vadd.f32 %v117, %v231
    %vm248 = vcmp.ge.s32.totalorder %v119, 4294967295
    %vm249 = vcmp.lt.s32.totalorder %v119, 31
    %vm250 = vmand %vm248, %vm249
    %s251 = sld [smem:[#allocation3 + $0x2]]
    %252 = vrot.lane.b32.xlu0 %v181, 127
    %v253 = vpop.permute.xlu0 %252
    %v255 = vsel %vm250, %v253, 0.0
    %v256 = vstv %s251
    %v257 = vmul.f32 %v256, %v255
    %v259 = vlaneseq
    %v260 = vshrl.u32 %v259, 7
    %v261 = vsub.s32 0, %v260
    %v262 = vrot.slane %v257, %v261
    %264 = vbcast.lane.b32.xlu0 %v262, 256
    %v265 = vpop.permute.xlu0 %264
    %s267 = sor.u32 256, 8
    %268 = vbcast.lane.b32.xlu0 %v262, %s267
    %v269 = vpop.permute.xlu0 %268
    %s271 = sor.u32 256, 16
    %272 = vbcast.lane.b32.xlu0 %v262, %s271
    %v273 = vpop.permute.xlu0 %272
    %s275 = sor.u32 256, 24
    %276 = vbcast.lane.b32.xlu0 %v262, %s275
    %v277 = vpop.permute.xlu0 %276
    %v278 = vlaneseq
    %v279 = vshrl.u32 %v278, 7
    %v280 = vsub.s32 1, %v279
    %v281 = vrot.slane %v257, %v280
    %283 = vbcast.lane.b32.xlu0 %v281, 256
    %v284 = vpop.permute.xlu0 %283
    %s286 = sor.u32 256, 8
    %287 = vbcast.lane.b32.xlu0 %v281, %s286
    %v288 = vpop.permute.xlu0 %287
    %s290 = sor.u32 256, 16
    %291 = vbcast.lane.b32.xlu0 %v281, %s290
    %v292 = vpop.permute.xlu0 %291
    %s294 = sor.u32 256, 24
    %295 = vbcast.lane.b32.xlu0 %v281, %s294
    %v296 = vpop.permute.xlu0 %295
    %v305 = vadd.f32 %v240, %v265
    %v306 = vadd.f32 %v241, %v269
    %v307 = vadd.f32 %v242, %v273
    %v308 = vadd.f32 %v243, %v277
    %v309 = vadd.f32 %v244, %v284
    %v310 = vadd.f32 %v245, %v288
    %v311 = vadd.f32 %v246, %v292
    %v312 = vadd.f32 %v247, %v296
    %v313 = vxor.u32 %v305, 2147483648
    %v314 = vxor.u32 %v306, 2147483648
    %v315 = vxor.u32 %v307, 2147483648
    %v316 = vxor.u32 %v308, 2147483648
    %v317 = vxor.u32 %v309, 2147483648
    %v318 = vxor.u32 %v310, 2147483648
    %v319 = vxor.u32 %v311, 2147483648
    %v320 = vxor.u32 %v312, 2147483648
    %v321 = vmul.f32 %v313, 1.442695
    %v322 = vpow.pop %v321
    %v323 = vmul.f32 %v314, 1.442695
    %v324 = vpow.pop %v323
    %v325 = vmul.f32 %v315, 1.442695
    %v326 = vpow.pop %v325
    %v327 = vmul.f32 %v316, 1.442695
    %v328 = vpow.pop %v327
    %v329 = vmul.f32 %v317, 1.442695
    %v330 = vpow.pop %v329
    %v331 = vmul.f32 %v318, 1.442695
    %v332 = vpow.pop %v331
    %v333 = vmul.f32 %v319, 1.442695
    %v334 = vpow.pop %v333
    %v335 = vmul.f32 %v320, 1.442695
    %v336 = vpow.pop %v335
    %v337 = vadd.f32 %v322, 1.0
    %v338 = vadd.f32 %v324, 1.0
    %v339 = vadd.f32 %v326, 1.0
    %v340 = vadd.f32 %v328, 1.0
    %v341 = vadd.f32 %v330, 1.0
    %v342 = vadd.f32 %v332, 1.0
    %v343 = vadd.f32 %v334, 1.0
    %v344 = vadd.f32 %v336, 1.0
    %v345 = vrcp.pop %v337
    %v346 = vmul.f32 1.0, %v345
    %v347 = vrcp.pop %v338
    %v348 = vmul.f32 1.0, %v347
    %v349 = vrcp.pop %v339
    %v350 = vmul.f32 1.0, %v349
    %v351 = vrcp.pop %v340
    %v352 = vmul.f32 1.0, %v351
    %v353 = vrcp.pop %v341
    %v354 = vmul.f32 1.0, %v353
    %v355 = vrcp.pop %v342
    %v356 = vmul.f32 1.0, %v355
    %v357 = vrcp.pop %v343
    %v358 = vmul.f32 1.0, %v357
    %v359 = vrcp.pop %v344
    %v360 = vmul.f32 1.0, %v359
    %362 = vset.pattern.permute.xlu0 0
    %363 = vperm.xlu0 %362, %v346
    %v364 = vpop.permute.xlu0 %363
    %367 = vset.pattern.permute.xlu0 0
    %368 = vperm.xlu0 %367, %v348
    %v369 = vpop.permute.xlu0 %368
    %372 = vset.pattern.permute.xlu0 0
    %373 = vperm.xlu0 %372, %v350
    %v374 = vpop.permute.xlu0 %373
    %377 = vset.pattern.permute.xlu0 0
    %378 = vperm.xlu0 %377, %v352
    %v379 = vpop.permute.xlu0 %378
    %382 = vset.pattern.permute.xlu0 0
    %383 = vperm.xlu0 %382, %v354
    %v384 = vpop.permute.xlu0 %383
    %387 = vset.pattern.permute.xlu0 0
    %388 = vperm.xlu0 %387, %v356
    %v389 = vpop.permute.xlu0 %388
    %392 = vset.pattern.permute.xlu0 0
    %393 = vperm.xlu0 %392, %v358
    %v394 = vpop.permute.xlu0 %393
    %397 = vset.pattern.permute.xlu0 0
    %398 = vperm.xlu0 %397, %v360
    %v399 = vpop.permute.xlu0 %398
    %v401 = vmul.f32 %v28, %v364
    %v402 = vmul.f32 %v29, %v364
    %v403 = vmul.f32 %v30, %v369
    %v404 = vmul.f32 %v31, %v369
    %v405 = vmul.f32 %v32, %v374
    %v406 = vmul.f32 %v33, %v374
    %v407 = vmul.f32 %v34, %v379
    %v408 = vmul.f32 %v35, %v379
    %v409 = vmul.f32 %v36, %v384
    %v410 = vmul.f32 %v37, %v384
    %v411 = vmul.f32 %v38, %v389
    %v412 = vmul.f32 %v39, %v389
    %v413 = vmul.f32 %v40, %v394
    %v414 = vmul.f32 %v41, %v394
    %v415 = vmul.f32 %v42, %v399
    %v416 = vmul.f32 %v43, %v399
    %417 = vst [vmem:[#allocation7] sm:$0xff] %v401
    %418 = vst [vmem:[#allocation7 + $0x8] sm:$0xff] %v402
    %419 = vst [vmem:[#allocation7 + $0x10] sm:$0xff] %v403
    %420 = vst [vmem:[#allocation7 + $0x18] sm:$0xff] %v404
    %421 = vst [vmem:[#allocation7 + $0x20] sm:$0xff] %v405
    %422 = vst [vmem:[#allocation7 + $0x28] sm:$0xff] %v406
    %423 = vst [vmem:[#allocation7 + $0x30] sm:$0xff] %v407
    %424 = vst [vmem:[#allocation7 + $0x38] sm:$0xff] %v408
    %425 = vst [vmem:[#allocation7 + $0x40] sm:$0xff] %v409
    %426 = vst [vmem:[#allocation7 + $0x48] sm:$0xff] %v410
    %427 = vst [vmem:[#allocation7 + $0x50] sm:$0xff] %v411
    %428 = vst [vmem:[#allocation7 + $0x58] sm:$0xff] %v412
    %429 = vst [vmem:[#allocation7 + $0x60] sm:$0xff] %v413
    %430 = vst [vmem:[#allocation7 + $0x68] sm:$0xff] %v414
    %431 = vst [vmem:[#allocation7 + $0x70] sm:$0xff] %v415
    %432 = vst [vmem:[#allocation7 + $0x78] sm:$0xff] %v416
    // Predicated region
    $region10: #{tpu_custom_call.1} parent=1 // pred_check
      _
    $region11: #{tpu_custom_call.1} parent=1 // pred_check_branch
      %434 = sbr.rel (0) target = $region13
    $region12: #{tpu_custom_call.1} parent=1 // pred_region
      %s436 = ssub.s32 2048, 2048
      %437 = vsyncadd [#allocation6], %s436
      %s438 = sshll.u32 [#allocation7], 4
      %s439 = int_to_ptr.vmem [resolvable:$true] %s438
      %444 = dma.vmem_to_hbm [thread:$0]  %s439, 2048, %s2, [#allocation6], 256, 256, 16
    $region13: #{tpu_custom_call.1} parent=1 // pred_fallthru
      _
    // Predicated region
    $region14: #{tpu_custom_call.1} parent=1 // pred_check
      _
    $region15: #{tpu_custom_call.1} parent=1 // pred_check_branch
      %446 = sbr.rel (0) target = $region17
    $region16: #{tpu_custom_call.1} parent=1 // pred_region
      %447 = dma.done [#allocation6], 2048
    $region17: #{tpu_custom_call.1} parent=1 // pred_fallthru
      _
    %448 = vsyncpa [#allocation5], 1
    %449 = vsyncpa [#allocation6], 1

</llo_original>
